<compile_context>
chip_gen: v5e
topology: v5e:2x2
jax: 0.10.0
libtpu: 0.0.40
codegen_flags: <defaults>
</compile_context>

<pallas_src>
import jax
import jax.numpy as jnp
from jax import lax
from jax.experimental import pallas as pl
from jax.experimental.pallas import tpu as pltpu


def _round_up(x, m):
    return ((x + m - 1) // m) * m


# ---------------------------------------------------------------------------
# Path A: embedding table resident in VMEM (small / medium vocab).
# ---------------------------------------------------------------------------
def _make_vmem_gather_kernel(tok_block, unroll):
    def kernel(idx_ref, w_ref, o_ref):
        # idx_ref : (n_pad,)            int32, SMEM (scalar prefetch)
        # w_ref   : (vocab, embed)      full table, VMEM (constant block index,
        #                               fetched from HBM once, kept resident)
        # o_ref   : (tok_block, embed)  VMEM output block
        base = pl.program_id(0) * tok_block

        def body(t, carry):
            row = idx_ref[base + t]
            o_ref[pl.ds(t, 1), :] = w_ref[pl.ds(row, 1), :]
            return carry

        lax.fori_loop(0, tok_block, body, 0, unroll=unroll)

    return kernel


# ---------------------------------------------------------------------------
# Path B: table stays in HBM, rows DMA-gathered straight into the output block.
# ---------------------------------------------------------------------------
def _make_hbm_gather_kernel(tok_block, n_tokens, num_blocks):
    tail = n_tokens - (num_blocks - 1) * tok_block  # static, in (0, tok_block]

    def kernel(idx_ref, w_hbm, o_ref, sem):
        # idx_ref : (n_pad,)            int32, SMEM (scalar prefetch)
        # w_hbm   : (vocab, embed)      raw HBM ref (manual DMA, no padding)
        # o_ref   : (tok_block, embed)  VMEM output block (DMA destination)
        # sem     : single shared DMA semaphore
        base = pl.program_id(0) * tok_block

        def gather(count):
            # Issue `count` independent row DMAs, all signalling the same
            # semaphore, so they are all in flight concurrently ...
            for t in range(count):
                row = idx_ref[base + t]
                pltpu.make_async_copy(
                    w_hbm.at[pl.ds(row, 1), :],
                    o_ref.at[pl.ds(t, 1), :],
                    sem,
                ).start()
            # ... then retire them with one aggregate wait: DMA semaphores
            # count bytes, and this descriptor's size equals the sum of the
            # `count` row copies issued above.
            pltpu.make_async_copy(
                o_ref.at[pl.ds(0, count), :],
                o_ref.at[pl.ds(0, count), :],
                sem,
            ).wait()

        if tail == tok_block:
            gather(tok_block)
        else:
            last = num_blocks - 1

            @pl.when(pl.program_id(0) != last)
            def _():
                gather(tok_block)

            @pl.when(pl.program_id(0) == last)
            def _():
                # Tail block: skip DMAs for padded tokens (their output rows
                # are sliced off by the wrapper, so they may stay garbage).
                gather(tail)

    return kernel


def expandable_embedding_forward(
    x,
    weight,
    *,
    tok_block=256,
    vmem_table_budget_bytes=16 * 1024 * 1024,  # keep well under v7x's 64 MiB VMEM
    force_hbm_gather=False,
):
    """F.embedding(x, weight) as a Pallas TPU kernel.

    x      : int array of shape (batch, seq)
    weight : float array of shape (vocab, embed)
    returns: float array of shape (batch, seq, embed)
    """
    batch, seq = x.shape
    vocab, embed = weight.shape
    n = batch * seq
    itemsize = jnp.dtype(weight.dtype).itemsize

    # Token-block size: multiple of 8 (sublane), never larger than needed.
    tok_block = max(8, _round_up(min(int(tok_block), n), 8))
    num_blocks = pl.cdiv(n, tok_block)
    n_pad = num_blocks * tok_block

    # TODO(synk): F.embedding raises on out-of-range ids; here they are clamped
    # into [0, vocab) instead (no kernel-side error path).
    idx_flat = jnp.clip(x.reshape(-1).astype(jnp.int32), 0, vocab - 1)
    if n_pad != n:
        idx_flat = jnp.pad(idx_flat, (0, n_pad - n))
    # TODO(synk): for very long batch*seq, feed ids as a blocked SMEM input
    # instead of scalar-prefetching the whole flat array (SMEM capacity).

    table_bytes = vocab * embed * itemsize
    block_bytes = tok_block * embed * itemsize
    use_vmem_table = (not force_hbm_gather) and (
        table_bytes + 4 * block_bytes <= vmem_table_budget_bytes
    )

    if use_vmem_table:
        kernel = _make_vmem_gather_kernel(tok_block, unroll=tok_block <= 64)
        in_specs = [
            # Whole table in VMEM; same block every grid step (fetched once).
            pl.BlockSpec((vocab, embed), lambda i, idx: (0, 0)),
        ]
        scratch_shapes = []
        vmem_bytes = table_bytes + 8 * block_bytes + (2 << 20)
    else:
        kernel = _make_hbm_gather_kernel(tok_block, n, num_blocks)
        in_specs = [
            # Table stays in HBM; rows are DMA'd manually into o_ref.
            pl.BlockSpec(memory_space=pl.ANY),
        ]
        scratch_shapes = [pltpu.SemaphoreType.DMA]  # one shared DMA semaphore
        vmem_bytes = 8 * block_bytes + (2 << 20)

    out = pl.pallas_call(
        kernel,
        out_shape=jax.ShapeDtypeStruct((n_pad, embed), weight.dtype),
        grid_spec=pltpu.PrefetchScalarGridSpec(
            num_scalar_prefetch=1,  # idx_flat -> SMEM
            grid=(num_blocks,),
            in_specs=in_specs,
            out_specs=pl.BlockSpec((tok_block, embed), lambda i, idx: (i, 0)),
            scratch_shapes=scratch_shapes,
        ),
        compiler_params=pltpu.CompilerParams(
            # Token blocks are independent -> shard across both v7x TCs.
            dimension_semantics=("parallel",),
            vmem_limit_bytes=max(32 * 1024 * 1024, vmem_bytes),
        ),
    )(idx_flat, weight)

    if n_pad != n:
        out = out[:n]
    return out.reshape(batch, seq, embed)


if __name__ == "__main__":
    # Module config (synthetic, deterministic init — mirrors
    # ExpandableEmbedding(vocab_size, embed_dim) with randn weights).
    vocab_size = 64
    embed_dim = 128
    batch, seq = 2, 8

    key = jax.random.PRNGKey(0)
    k_w, k_x = jax.random.split(key)
    weight = jax.random.normal(k_w, (vocab_size, embed_dim), dtype=jnp.float32)
    x = jax.random.randint(k_x, (batch, seq), 0, vocab_size, dtype=jnp.int32)

    ref = jnp.take(weight, x.reshape(-1), axis=0).reshape(batch, seq, embed_dim)

    # Fast path: table resident in VMEM (demo table is 32 KiB).
    out = jax.block_until_ready(expandable_embedding_forward(x, weight))
    assert out.shape == (batch, seq, embed_dim)
    assert jnp.allclose(out, ref, atol=1e-5, rtol=1e-5), "VMEM path mismatch"

    # Large-table path: table in HBM, rows DMA-gathered into the output block.
    out_hbm = jax.block_until_ready(
        expandable_embedding_forward(x, weight, force_hbm_gather=True)
    )
    assert jnp.allclose(out_hbm, ref, atol=1e-5, rtol=1e-5), "HBM path mismatch"

    # Ragged token count (exercises multi-block grid + tail-guarded DMAs).
    x2 = jax.random.randint(k_x, (3, 7), 0, vocab_size, dtype=jnp.int32)
    ref2 = jnp.take(weight, x2.reshape(-1), axis=0).reshape(3, 7, embed_dim)
    out2 = jax.block_until_ready(
        expandable_embedding_forward(x2, weight, tok_block=8)
    )
    assert jnp.allclose(out2, ref2, atol=1e-5, rtol=1e-5), "tail (VMEM) mismatch"
    out2h = jax.block_until_ready(
        expandable_embedding_forward(x2, weight, tok_block=8, force_hbm_gather=True)
    )
    assert jnp.allclose(out2h, ref2, atol=1e-5, rtol=1e-5), "tail (HBM) mismatch"

    print("KERNEL_OK")
</pallas_src>

<mosaic_0001>
module attributes {stable_mosaic.version = 11 : i64} {
  func.func @kernel(%arg0: i32, %arg1: memref<16xi32, #tpu.memory_space<smem>>, %arg2: memref<64x128xf32, #tpu.memory_space<vmem>>, %arg3: memref<16x128xf32, #tpu.memory_space<vmem>>) attributes {dimension_semantics = [#tpu.dimension_semantics<parallel>], iteration_bounds = array<i64: 1>, scalar_prefetch = 1 : i64, scratch_operands = 0 : i64, tpu.core_type = #tpu.core_type<tc>, window_params = [{pipeline_mode = #tpu.pipeline_mode<synchronous>, transform_indices = @transform_0, window_bounds = array<i64: 64, 128>}, {transform_indices = @transform_1, window_bounds = array<i64: 16, 128>}]} {
    %c16_i32 = arith.constant 16 : i32
    %0 = arith.muli %arg0, %c16_i32 : i32
    %c0_i32 = arith.constant 0 : i32
    %1 = arith.addi %0, %c0_i32 : i32
    %2 = arith.index_cast %1 : i32 to index
    %3 = memref.load %arg1[%2] : memref<16xi32, #tpu.memory_space<smem>>
    %4 = arith.index_cast %3 : i32 to index
    %c0 = arith.constant 0 : index
    %5 = vector.load %arg2[%4, %c0] : memref<64x128xf32, #tpu.memory_space<vmem>>, vector<1x128xf32>
    %6 = arith.index_cast %c0_i32 : i32 to index
    %c0_0 = arith.constant 0 : index
    %7 = vector.load %arg3[%6, %c0_0] : memref<16x128xf32, #tpu.memory_space<vmem>>, vector<1x128xf32>
    tpu.vector_store %arg3[%6, %c0_0], %5 {strides = array<i32>} : memref<16x128xf32, #tpu.memory_space<vmem>>, vector<1x128xf32>,
    %c1_i32 = arith.constant 1 : i32
    %8 = arith.addi %0, %c1_i32 : i32
    %9 = arith.index_cast %8 : i32 to index
    %10 = memref.load %arg1[%9] : memref<16xi32, #tpu.memory_space<smem>>
    %11 = arith.index_cast %10 : i32 to index
    %c0_1 = arith.constant 0 : index
    %12 = vector.load %arg2[%11, %c0_1] : memref<64x128xf32, #tpu.memory_space<vmem>>, vector<1x128xf32>
    %13 = arith.index_cast %c1_i32 : i32 to index
    %c0_2 = arith.constant 0 : index
    %14 = vector.load %arg3[%13, %c0_2] : memref<16x128xf32, #tpu.memory_space<vmem>>, vector<1x128xf32>
    tpu.vector_store %arg3[%13, %c0_2], %12 {strides = array<i32>} : memref<16x128xf32, #tpu.memory_space<vmem>>, vector<1x128xf32>,
    %c2_i32 = arith.constant 2 : i32
    %15 = arith.addi %0, %c2_i32 : i32
    %16 = arith.index_cast %15 : i32 to index
    %17 = memref.load %arg1[%16] : memref<16xi32, #tpu.memory_space<smem>>
    %18 = arith.index_cast %17 : i32 to index
    %c0_3 = arith.constant 0 : index
    %19 = vector.load %arg2[%18, %c0_3] : memref<64x128xf32, #tpu.memory_space<vmem>>, vector<1x128xf32>
    %20 = arith.index_cast %c2_i32 : i32 to index
    %c0_4 = arith.constant 0 : index
    %21 = vector.load %arg3[%20, %c0_4] : memref<16x128xf32, #tpu.memory_space<vmem>>, vector<1x128xf32>
    tpu.vector_store %arg3[%20, %c0_4], %19 {strides = array<i32>} : memref<16x128xf32, #tpu.memory_space<vmem>>, vector<1x128xf32>,
    %c3_i32 = arith.constant 3 : i32
    %22 = arith.addi %0, %c3_i32 : i32
    %23 = arith.index_cast %22 : i32 to index
    %24 = memref.load %arg1[%23] : memref<16xi32, #tpu.memory_space<smem>>
    %25 = arith.index_cast %24 : i32 to index
    %c0_5 = arith.constant 0 : index
    %26 = vector.load %arg2[%25, %c0_5] : memref<64x128xf32, #tpu.memory_space<vmem>>, vector<1x128xf32>
    %27 = arith.index_cast %c3_i32 : i32 to index
    %c0_6 = arith.constant 0 : index
    %28 = vector.load %arg3[%27, %c0_6] : memref<16x128xf32, #tpu.memory_space<vmem>>, vector<1x128xf32>
    tpu.vector_store %arg3[%27, %c0_6], %26 {strides = array<i32>} : memref<16x128xf32, #tpu.memory_space<vmem>>, vector<1x128xf32>,
    %c4_i32 = arith.constant 4 : i32
    %29 = arith.addi %0, %c4_i32 : i32
    %30 = arith.index_cast %29 : i32 to index
    %31 = memref.load %arg1[%30] : memref<16xi32, #tpu.memory_space<smem>>
    %32 = arith.index_cast %31 : i32 to index
    %c0_7 = arith.constant 0 : index
    %33 = vector.load %arg2[%32, %c0_7] : memref<64x128xf32, #tpu.memory_space<vmem>>, vector<1x128xf32>
    %34 = arith.index_cast %c4_i32 : i32 to index
    %c0_8 = arith.constant 0 : index
    %35 = vector.load %arg3[%34, %c0_8] : memref<16x128xf32, #tpu.memory_space<vmem>>, vector<1x128xf32>
    tpu.vector_store %arg3[%34, %c0_8], %33 {strides = array<i32>} : memref<16x128xf32, #tpu.memory_space<vmem>>, vector<1x128xf32>,
    %c5_i32 = arith.constant 5 : i32
    %36 = arith.addi %0, %c5_i32 : i32
    %37 = arith.index_cast %36 : i32 to index
    %38 = memref.load %arg1[%37] : memref<16xi32, #tpu.memory_space<smem>>
    %39 = arith.index_cast %38 : i32 to index
    %c0_9 = arith.constant 0 : index
    %40 = vector.load %arg2[%39, %c0_9] : memref<64x128xf32, #tpu.memory_space<vmem>>, vector<1x128xf32>
    %41 = arith.index_cast %c5_i32 : i32 to index
    %c0_10 = arith.constant 0 : index
    %42 = vector.load %arg3[%41, %c0_10] : memref<16x128xf32, #tpu.memory_space<vmem>>, vector<1x128xf32>
    tpu.vector_store %arg3[%41, %c0_10], %40 {strides = array<i32>} : memref<16x128xf32, #tpu.memory_space<vmem>>, vector<1x128xf32>,
    %c6_i32 = arith.constant 6 : i32
    %43 = arith.addi %0, %c6_i32 : i32
    %44 = arith.index_cast %43 : i32 to index
    %45 = memref.load %arg1[%44] : memref<16xi32, #tpu.memory_space<smem>>
    %46 = arith.index_cast %45 : i32 to index
    %c0_11 = arith.constant 0 : index
    %47 = vector.load %arg2[%46, %c0_11] : memref<64x128xf32, #tpu.memory_space<vmem>>, vector<1x128xf32>
    %48 = arith.index_cast %c6_i32 : i32 to index
    %c0_12 = arith.constant 0 : index
    %49 = vector.load %arg3[%48, %c0_12] : memref<16x128xf32, #tpu.memory_space<vmem>>, vector<1x128xf32>
    tpu.vector_store %arg3[%48, %c0_12], %47 {strides = array<i32>} : memref<16x128xf32, #tpu.memory_space<vmem>>, vector<1x128xf32>,
    %c7_i32 = arith.constant 7 : i32
    %50 = arith.addi %0, %c7_i32 : i32
    %51 = arith.index_cast %50 : i32 to index
    %52 = memref.load %arg1[%51] : memref<16xi32, #tpu.memory_space<smem>>
    %53 = arith.index_cast %52 : i32 to index
    %c0_13 = arith.constant 0 : index
    %54 = vector.load %arg2[%53, %c0_13] : memref<64x128xf32, #tpu.memory_space<vmem>>, vector<1x128xf32>
    %55 = arith.index_cast %c7_i32 : i32 to index
    %c0_14 = arith.constant 0 : index
    %56 = vector.load %arg3[%55, %c0_14] : memref<16x128xf32, #tpu.memory_space<vmem>>, vector<1x128xf32>
    tpu.vector_store %arg3[%55, %c0_14], %54 {strides = array<i32>} : memref<16x128xf32, #tpu.memory_space<vmem>>, vector<1x128xf32>,
    %c8_i32 = arith.constant 8 : i32
    %57 = arith.addi %0, %c8_i32 : i32
    %58 = arith.index_cast %57 : i32 to index
    %59 = memref.load %arg1[%58] : memref<16xi32, #tpu.memory_space<smem>>
    %60 = arith.index_cast %59 : i32 to index
    %c0_15 = arith.constant 0 : index
    %61 = vector.load %arg2[%60, %c0_15] : memref<64x128xf32, #tpu.memory_space<vmem>>, vector<1x128xf32>
    %62 = arith.index_cast %c8_i32 : i32 to index
    %c0_16 = arith.constant 0 : index
    %63 = vector.load %arg3[%62, %c0_16] : memref<16x128xf32, #tpu.memory_space<vmem>>, vector<1x128xf32>
    tpu.vector_store %arg3[%62, %c0_16], %61 {strides = array<i32>} : memref<16x128xf32, #tpu.memory_space<vmem>>, vector<1x128xf32>,
    %c9_i32 = arith.constant 9 : i32
    %64 = arith.addi %0, %c9_i32 : i32
    %65 = arith.index_cast %64 : i32 to index
    %66 = memref.load %arg1[%65] : memref<16xi32, #tpu.memory_space<smem>>
    %67 = arith.index_cast %66 : i32 to index
    %c0_17 = arith.constant 0 : index
    %68 = vector.load %arg2[%67, %c0_17] : memref<64x128xf32, #tpu.memory_space<vmem>>, vector<1x128xf32>
    %69 = arith.index_cast %c9_i32 : i32 to index
    %c0_18 = arith.constant 0 : index
    %70 = vector.load %arg3[%69, %c0_18] : memref<16x128xf32, #tpu.memory_space<vmem>>, vector<1x128xf32>
    tpu.vector_store %arg3[%69, %c0_18], %68 {strides = array<i32>} : memref<16x128xf32, #tpu.memory_space<vmem>>, vector<1x128xf32>,
    %c10_i32 = arith.constant 10 : i32
    %71 = arith.addi %0, %c10_i32 : i32
    %72 = arith.index_cast %71 : i32 to index
    %73 = memref.load %arg1[%72] : memref<16xi32, #tpu.memory_space<smem>>
    %74 = arith.index_cast %73 : i32 to index
    %c0_19 = arith.constant 0 : index
    %75 = vector.load %arg2[%74, %c0_19] : memref<64x128xf32, #tpu.memory_space<vmem>>, vector<1x128xf32>
    %76 = arith.index_cast %c10_i32 : i32 to index
    %c0_20 = arith.constant 0 : index
    %77 = vector.load %arg3[%76, %c0_20] : memref<16x128xf32, #tpu.memory_space<vmem>>, vector<1x128xf32>
    tpu.vector_store %arg3[%76, %c0_20], %75 {strides = array<i32>} : memref<16x128xf32, #tpu.memory_space<vmem>>, vector<1x128xf32>,
    %c11_i32 = arith.constant 11 : i32
    %78 = arith.addi %0, %c11_i32 : i32
    %79 = arith.index_cast %78 : i32 to index
    %80 = memref.load %arg1[%79] : memref<16xi32, #tpu.memory_space<smem>>
    %81 = arith.index_cast %80 : i32 to index
    %c0_21 = arith.constant 0 : index
    %82 = vector.load %arg2[%81, %c0_21] : memref<64x128xf32, #tpu.memory_space<vmem>>, vector<1x128xf32>
    %83 = arith.index_cast %c11_i32 : i32 to index
    %c0_22 = arith.constant 0 : index
    %84 = vector.load %arg3[%83, %c0_22] : memref<16x128xf32, #tpu.memory_space<vmem>>, vector<1x128xf32>
    tpu.vector_store %arg3[%83, %c0_22], %82 {strides = array<i32>} : memref<16x128xf32, #tpu.memory_space<vmem>>, vector<1x128xf32>,
    %c12_i32 = arith.constant 12 : i32
    %85 = arith.addi %0, %c12_i32 : i32
    %86 = arith.index_cast %85 : i32 to index
    %87 = memref.load %arg1[%86] : memref<16xi32, #tpu.memory_space<smem>>
    %88 = arith.index_cast %87 : i32 to index
    %c0_23 = arith.constant 0 : index
    %89 = vector.load %arg2[%88, %c0_23] : memref<64x128xf32, #tpu.memory_space<vmem>>, vector<1x128xf32>
    %90 = arith.index_cast %c12_i32 : i32 to index
    %c0_24 = arith.constant 0 : index
    %91 = vector.load %arg3[%90, %c0_24] : memref<16x128xf32, #tpu.memory_space<vmem>>, vector<1x128xf32>
    tpu.vector_store %arg3[%90, %c0_24], %89 {strides = array<i32>} : memref<16x128xf32, #tpu.memory_space<vmem>>, vector<1x128xf32>,
    %c13_i32 = arith.constant 13 : i32
    %92 = arith.addi %0, %c13_i32 : i32
    %93 = arith.index_cast %92 : i32 to index
    %94 = memref.load %arg1[%93] : memref<16xi32, #tpu.memory_space<smem>>
    %95 = arith.index_cast %94 : i32 to index
    %c0_25 = arith.constant 0 : index
    %96 = vector.load %arg2[%95, %c0_25] : memref<64x128xf32, #tpu.memory_space<vmem>>, vector<1x128xf32>
    %97 = arith.index_cast %c13_i32 : i32 to index
    %c0_26 = arith.constant 0 : index
    %98 = vector.load %arg3[%97, %c0_26] : memref<16x128xf32, #tpu.memory_space<vmem>>, vector<1x128xf32>
    tpu.vector_store %arg3[%97, %c0_26], %96 {strides = array<i32>} : memref<16x128xf32, #tpu.memory_space<vmem>>, vector<1x128xf32>,
    %c14_i32 = arith.constant 14 : i32
    %99 = arith.addi %0, %c14_i32 : i32
    %100 = arith.index_cast %99 : i32 to index
    %101 = memref.load %arg1[%100] : memref<16xi32, #tpu.memory_space<smem>>
    %102 = arith.index_cast %101 : i32 to index
    %c0_27 = arith.constant 0 : index
    %103 = vector.load %arg2[%102, %c0_27] : memref<64x128xf32, #tpu.memory_space<vmem>>, vector<1x128xf32>
    %104 = arith.index_cast %c14_i32 : i32 to index
    %c0_28 = arith.constant 0 : index
    %105 = vector.load %arg3[%104, %c0_28] : memref<16x128xf32, #tpu.memory_space<vmem>>, vector<1x128xf32>
    tpu.vector_store %arg3[%104, %c0_28], %103 {strides = array<i32>} : memref<16x128xf32, #tpu.memory_space<vmem>>, vector<1x128xf32>,
    %c15_i32 = arith.constant 15 : i32
    %106 = arith.addi %0, %c15_i32 : i32
    %107 = arith.index_cast %106 : i32 to index
    %108 = memref.load %arg1[%107] : memref<16xi32, #tpu.memory_space<smem>>
    %109 = arith.index_cast %108 : i32 to index
    %c0_29 = arith.constant 0 : index
    %110 = vector.load %arg2[%109, %c0_29] : memref<64x128xf32, #tpu.memory_space<vmem>>, vector<1x128xf32>
    %111 = arith.index_cast %c15_i32 : i32 to index
    %c0_30 = arith.constant 0 : index
    %112 = vector.load %arg3[%111, %c0_30] : memref<16x128xf32, #tpu.memory_space<vmem>>, vector<1x128xf32>
    tpu.vector_store %arg3[%111, %c0_30], %110 {strides = array<i32>} : memref<16x128xf32, #tpu.memory_space<vmem>>, vector<1x128xf32>,
    %c16_i32_31 = arith.constant 16 : i32
    return
  }
  func.func @transform_0(%arg0: i32, %arg1: memref<16xi32, #tpu.memory_space<smem>>) -> (i32, i32) {
    %c0_i32 = arith.constant 0 : i32
    %c0_i32_0 = arith.constant 0 : i32
    %c0_i32_1 = arith.constant 0 : i32
    return %c0_i32, %c0_i32_0 : i32, i32
  }
  func.func @transform_1(%arg0: i32, %arg1: memref<16xi32, #tpu.memory_space<smem>>) -> (i32, i32) {
    %c0_i32 = arith.constant 0 : i32
    %c0_i32_0 = arith.constant 0 : i32
    return %arg0, %c0_i32 : i32, i32
  }
}

</mosaic_0001>

<llo_original>
// kernel: tpu_custom_call.1
$region0: #{tpu_custom_call.1}
  #allocation0 [shape = 'u32[]', space=smem, size = 0x4, offset = 0x4, fixed_abs, tag = 'smem constant byte address 0x4 - core index']
  #allocation1 [shape = 'u32[72,128]{1,0:T(1,128)}', space=vmem, size = 0x9000, scoped, tag = 'internal scratch']
  #allocation2 [shape = 's32[1]{0}', space=sflag, size = 0x4, scoped, tag = 'scoped memory for tpu_custom_call.1']
  #allocation3 [shape = 'u8[512]{0}', space=smem, size = 0x200, scoped, tag = 'prefetched SMEM operand 0']
  %s0 = inlined_call_operand.hbm [shape: s32[16], index: 0, kind: input, shape index: {}]
  %s1 = inlined_call_operand.hbm [shape: f32[64,128], index: 1, kind: input, shape index: {}]
  %s2 = inlined_call_operand.hbm [shape: f32[16,128], index: 2, kind: output, shape index: {}]
  %s3 = sld [smem:[#allocation0]]
  $region18: #{tpu_custom_call.1} parent=0
    _
  %s5 = ssub.s32 1, %s3
  %s6 = scalar_select 0, %s5, %s3
  %s8 = sshll.u32 %s0, 4
  %s9 = int_to_ptr.hbm [resolvable:$true] %s8
  %11 = dma.hbm_to_smem %s9, 16, [#allocation3], [#allocation2]
  %13 = dma.done [#allocation2], 16
  %14 = sfence
  $region1: #{tpu_custom_call.1} parent=0
    #allocation4 [shape = 'u8[32768]{0}', space=vmem, size = 0x8000, scoped, tag = 'input window, operand 1, single buffered']
    #allocation5 [shape = 's32[1]{0}', space=sflag, size = 0x4, scoped, tag = 'scoped memory for tpu_custom_call.1']
    #allocation6 [shape = 's32[1]{0}', space=sflag, size = 0x4, scoped, tag = 'scoped memory for tpu_custom_call.1']
    #allocation7 [shape = 'u8[8192]{0}', space=vmem, size = 0x2000, scoped, tag = 'output window, operand 0, single buffered']
    %15 = vsyncpa [#allocation5], 0
    %16 = vsyncpa [#allocation6], 0
    // Predicated region
    $region2: #{tpu_custom_call.1} parent=1 // pred_check
      _
    $region3: #{tpu_custom_call.1} parent=1 // pred_check_branch
      %18 = sbr.rel (0) target = $region5
    $region4: #{tpu_custom_call.1} parent=1 // pred_region
      %20 = vsyncadd [#allocation5], 0
      %s21 = sshll.u32 %s1, 4
      %s22 = int_to_ptr.hbm [resolvable:$true] %s21
      %s23 = sshll.u32 [#allocation4], 4
      %s24 = int_to_ptr.vmem [resolvable:$true] %s23
      %29 = dma.hbm_to_vmem [thread:$0]  %s22, 1024, %s24, [#allocation5], 128, 128, 8
    $region5: #{tpu_custom_call.1} parent=1 // pred_fallthru
      _
    // Predicated region
    $region6: #{tpu_custom_call.1} parent=1 // pred_check
      _
    $region7: #{tpu_custom_call.1} parent=1 // pred_check_branch
      %31 = sbr.rel (0) target = $region9
    $region8: #{tpu_custom_call.1} parent=1 // pred_region
      %33 = dma.done [#allocation5], 1024
    $region9: #{tpu_custom_call.1} parent=1 // pred_fallthru
      _
    %s34 = smul.u32 0, 16
    %s35 = sld [smem:[#allocation3 + %s34]]
    %s36 = scalar_lea.vmem [#allocation4], %s35
    %v37 = vld [vmem:[%s36] sm:$0x1]
    %38 = vst [vmem:[#allocation7] sm:$0x1] %v37
    %s39 = sadd.s32 %s34, 1
    %s40 = sld [smem:[#allocation3 + %s39]]
    %s41 = scalar_lea.vmem [#allocation4], %s40
    %v42 = vld [vmem:[%s41] sm:$0x1]
    %43 = vst [vmem:[#allocation7 + $0x1] sm:$0x1] %v42
    %s44 = sadd.s32 %s34, 2
    %s45 = sld [smem:[#allocation3 + %s44]]
    %s46 = scalar_lea.vmem [#allocation4], %s45
    %v47 = vld [vmem:[%s46] sm:$0x1]
    %48 = vst [vmem:[#allocation7 + $0x2] sm:$0x1] %v47
    %s49 = sadd.s32 %s34, 3
    %s50 = sld [smem:[#allocation3 + %s49]]
    %s51 = scalar_lea.vmem [#allocation4], %s50
    %v52 = vld [vmem:[%s51] sm:$0x1]
    %53 = vst [vmem:[#allocation7 + $0x3] sm:$0x1] %v52
    %s54 = sadd.s32 %s34, 4
    %s55 = sld [smem:[#allocation3 + %s54]]
    %s56 = scalar_lea.vmem [#allocation4], %s55
    %v57 = vld [vmem:[%s56] sm:$0x1]
    %58 = vst [vmem:[#allocation7 + $0x4] sm:$0x1] %v57
    %s59 = sadd.s32 %s34, 5
    %s60 = sld [smem:[#allocation3 + %s59]]
    %s61 = scalar_lea.vmem [#allocation4], %s60
    %v62 = vld [vmem:[%s61] sm:$0x1]
    %63 = vst [vmem:[#allocation7 + $0x5] sm:$0x1] %v62
    %s64 = sadd.s32 %s34, 6
    %s65 = sld [smem:[#allocation3 + %s64]]
    %s66 = scalar_lea.vmem [#allocation4], %s65
    %v67 = vld [vmem:[%s66] sm:$0x1]
    %68 = vst [vmem:[#allocation7 + $0x6] sm:$0x1] %v67
    %s69 = sadd.s32 %s34, 7
    %s70 = sld [smem:[#allocation3 + %s69]]
    %s71 = scalar_lea.vmem [#allocation4], %s70
    %v72 = vld [vmem:[%s71] sm:$0x1]
    %73 = vst [vmem:[#allocation7 + $0x7] sm:$0x1] %v72
    %s74 = sadd.s32 %s34, 8
    %s75 = sld [smem:[#allocation3 + %s74]]
    %s76 = scalar_lea.vmem [#allocation4], %s75
    %v77 = vld [vmem:[%s76] sm:$0x1]
    %78 = vst [vmem:[#allocation7 + $0x8] sm:$0x1] %v77
    %s79 = sadd.s32 %s34, 9
    %s80 = sld [smem:[#allocation3 + %s79]]
    %s81 = scalar_lea.vmem [#allocation4], %s80
    %v82 = vld [vmem:[%s81] sm:$0x1]
    %83 = vst [vmem:[#allocation7 + $0x9] sm:$0x1] %v82
    %s84 = sadd.s32 %s34, 10
    %s85 = sld [smem:[#allocation3 + %s84]]
    %s86 = scalar_lea.vmem [#allocation4], %s85
    %v87 = vld [vmem:[%s86] sm:$0x1]
    %88 = vst [vmem:[#allocation7 + $0xa] sm:$0x1] %v87
    %s89 = sadd.s32 %s34, 11
    %s90 = sld [smem:[#allocation3 + %s89]]
    %s91 = scalar_lea.vmem [#allocation4], %s90
    %v92 = vld [vmem:[%s91] sm:$0x1]
    %93 = vst [vmem:[#allocation7 + $0xb] sm:$0x1] %v92
    %s94 = sadd.s32 %s34, 12
    %s95 = sld [smem:[#allocation3 + %s94]]
    %s96 = scalar_lea.vmem [#allocation4], %s95
    %v97 = vld [vmem:[%s96] sm:$0x1]
    %98 = vst [vmem:[#allocation7 + $0xc] sm:$0x1] %v97
    %s99 = sadd.s32 %s34, 13
    %s100 = sld [smem:[#allocation3 + %s99]]
    %s101 = scalar_lea.vmem [#allocation4], %s100
    %v102 = vld [vmem:[%s101] sm:$0x1]
    %103 = vst [vmem:[#allocation7 + $0xd] sm:$0x1] %v102
    %s104 = sadd.s32 %s34, 14
    %s105 = sld [smem:[#allocation3 + %s104]]
    %s106 = scalar_lea.vmem [#allocation4], %s105
    %v107 = vld [vmem:[%s106] sm:$0x1]
    %108 = vst [vmem:[#allocation7 + $0xe] sm:$0x1] %v107
    %s109 = sadd.s32 %s34, 15
    %s110 = sld [smem:[#allocation3 + %s109]]
    %s111 = scalar_lea.vmem [#allocation4], %s110
    %v112 = vld [vmem:[%s111] sm:$0x1]
    %113 = vst [vmem:[#allocation7 + $0xf] sm:$0x1] %v112
    // Predicated region
    $region10: #{tpu_custom_call.1} parent=1 // pred_check
      _
    $region11: #{tpu_custom_call.1} parent=1 // pred_check_branch
      %115 = sbr.rel (0) target = $region13
    $region12: #{tpu_custom_call.1} parent=1 // pred_region
      %117 = vsyncadd [#allocation6], 0
      %s118 = sshll.u32 [#allocation7], 4
      %s119 = int_to_ptr.vmem [resolvable:$true] %s118
      %s120 = sshll.u32 %s2, 4
      %s121 = int_to_ptr.hbm [resolvable:$true] %s120
      %126 = dma.vmem_to_hbm [thread:$0]  %s119, 256, %s121, [#allocation6], 128, 128, 8
    $region13: #{tpu_custom_call.1} parent=1 // pred_fallthru
      _
    // Predicated region
    $region14: #{tpu_custom_call.1} parent=1 // pred_check
      _
    $region15: #{tpu_custom_call.1} parent=1 // pred_check_branch
      %128 = sbr.rel (0) target = $region17
    $region16: #{tpu_custom_call.1} parent=1 // pred_region
      %130 = dma.done [#allocation6], 256
    $region17: #{tpu_custom_call.1} parent=1 // pred_fallthru
      _
    %131 = vsyncpa [#allocation5], 1
    %132 = vsyncpa [#allocation6], 1

</llo_original>
